<compile_context>
chip_gen: v7x
topology: tpu7x:2x2x1
jax: 0.10.0
libtpu: 0.0.40
codegen_flags: <defaults>
</compile_context>

<pallas_src>
import functools

import jax
import jax.numpy as jnp
from jax.experimental import pallas as pl
from jax.experimental.pallas import tpu as pltpu


def _qdq_kernel(inv_s_ref, s_ref, lo_ref, x_ref, o_ref, *, q_range):
    """out = clamp(round(x * inv_s), lo, lo + q_range) * s.

    zero_point is folded into lo; hi = lo + q_range with q_range = repr_max - repr_min
    a compile-time f32 constant (exact: bounds/zp are small integral floats).
    """
    x = x_ref[...].astype(jnp.float32)
    inv_s = inv_s_ref[...]          # (block_c, 1) -- broadcasts over the lane dim
    s = s_ref[...]
    lo = lo_ref[...]
    hi = lo + q_range
    q = jnp.clip(jnp.round(x * inv_s), lo, hi)
    o_ref[...] = (q * s).astype(o_ref.dtype)


def _sublane_pack(dtype):
    """Native second-minor tile for the dtype: 8 (f32), 16 (bf16), 32 (int8/fp8)."""
    return {2: 16, 1: 32}.get(jnp.dtype(dtype).itemsize, 8)


def _has_two_tensorcores():
    """True only on chips whose TensorCores share a pallas grid (v7x megacore)."""
    try:
        kind = jax.devices()[0].device_kind.lower()
    except Exception:
        return False
    return ("v7" in kind) or ("7x" in kind)


def _choose_tiles(C, F, dtype, *, two_cores, target_bytes=2 * 1024 * 1024):
    """Pick (block_c, block_f): ~2 MiB f32 working set per block, lane-dense."""
    esize = 4  # size by the in-kernel f32 footprint, not the (possibly bf16) I/O dtype
    pack = _sublane_pack(dtype)

    # Lane tile: full row if it fits with `pack` channel rows, else a 128-multiple.
    if F * pack * esize <= target_bytes:
        block_f = F
    else:
        block_f = max(128, ((target_bytes // (pack * esize)) // 128) * 128)
        block_f = min(block_f, F)

    # Channel tile: fill the target block; native-pack multiple when C allows it.
    max_c = max(1, target_bytes // (block_f * esize))
    if C <= pack:
        block_c = C
    else:
        block_c = min(C, max_c)
        block_c = max(pack, (block_c // pack) * pack)

    # v7x megacore: aim for >= 4 grid steps so both TensorCores stay loaded.
    # Single-TC chips (v5e/v6e) keep one big block: splitting only adds per-step
    # pipeline overhead there.
    if two_cores:
        while pl.cdiv(C, block_c) * pl.cdiv(F, block_f) < 4:
            if block_c >= 2 * pack:
                block_c = ((block_c // 2) // pack) * pack or pack
            elif block_f >= 256:
                block_f = max(128, ((block_f // 2) // 128) * 128)
            else:
                break
    return block_c, block_f


def uniform_affine_quant_forward(x2d, inv_scale, scale, lo, q_range):
    """x2d: [C, F] float array; qparams: [C, 1] float32. Returns [C, F] in x2d.dtype."""
    C, F = x2d.shape
    block_c, block_f = _choose_tiles(C, F, x2d.dtype, two_cores=_has_two_tensorcores())
    grid = (pl.cdiv(C, block_c), pl.cdiv(F, block_f))

    # qparams are tiny; the pipeline DMAs just the (block_c, 1) rows per step.
    qparam_spec = pl.BlockSpec((block_c, 1), lambda i, j: (i, 0))
    x_spec = pl.BlockSpec((block_c, block_f), lambda i, j: (i, j))

    kernel = functools.partial(_qdq_kernel, q_range=float(q_range))

    return pl.pallas_call(
        kernel,
        out_shape=jax.ShapeDtypeStruct((C, F), x2d.dtype),
        grid_spec=pltpu.PrefetchScalarGridSpec(
            num_scalar_prefetch=0,
            grid=grid,
            in_specs=[qparam_spec, qparam_spec, qparam_spec, x_spec],
            out_specs=x_spec,
        ),
        compiler_params=pltpu.CompilerParams(
            dimension_semantics=("parallel", "parallel"),
            vmem_limit_bytes=32 * 1024 * 1024,
        ),
    )(inv_scale, scale, lo, x2d)


def _per_tensor_2d(N, dtype):
    """Sublane-dense 2-D factorization of a flat length-N tensor (per-tensor quant)."""
    pack = _sublane_pack(dtype)
    rows, r = 1, pack
    while N % r == 0 and N // r >= 128:
        rows = r
        r *= 2
    return rows, N // rows


class UniformAffineQuantizerJAX:
    """JAX port of UniformAffineQuantizer (forward = dequantize(quantize(x))).

    Glue mirroring __init__ / _define_repr_min_max / compute_qparams runs in plain
    JAX; the hot elementwise quant-dequant path runs in the Pallas kernel.
    round_ste == round in the forward pass (STE only changes gradients).
    NOTE: degenerate (constant) channels get scaler floored at 1e-8 instead of the
    torch module's inf/NaN -- intentional semantic difference.
    """

    def __init__(self, org_weight, dst_dtype="INT8", per_channel=True):
        assert dst_dtype in ("INT8", "INT4")
        self._n_bits = int(dst_dtype[-1])
        self.per_channel = per_channel

        # _define_repr_min_max (one_side_dist)
        w_min = float(jnp.min(org_weight))
        w_max = float(jnp.max(org_weight))
        self.one_side_dist = "pos" if w_min >= 0.0 else ("neg" if w_max <= 0.0 else "no")
        if self.one_side_dist != "no":
            self._repr_min, self._repr_max = 0, 2 ** self._n_bits - 1
        else:
            self._repr_min = -(2 ** (self._n_bits - 1))
            self._repr_max = 2 ** (self._n_bits - 1) - 1
        self._q_range = float(self._repr_max - self._repr_min)

        # compute_qparams with per-channel (dim-0) min/max.
        w32 = org_weight.astype(jnp.float32)
        if per_channel:
            flat = w32.reshape(w32.shape[0], -1)
            _min = jnp.min(flat, axis=1)
            _max = jnp.max(flat, axis=1)
        else:
            _min = jnp.min(w32).reshape(1)
            _max = jnp.max(w32).reshape(1)
        scaler = (_max - _min) / self._q_range
        scaler = jnp.maximum(scaler, 1e-8)  # guard degenerate channels
        self._scaler = scaler.reshape(-1, 1).astype(jnp.float32)               # [C,1]
        _min = _min.reshape(-1, 1).astype(jnp.float32)
        self._zero_point = (-jnp.round(_min / self._scaler)
                            + self._repr_min).astype(jnp.float32)              # [C,1]

        # Kernel-side precomputation: exact per-channel reciprocal; zero-point folded
        # into the lower clamp bound (upper bound is lo + q_range, rebuilt in-kernel).
        self._inv_scaler = (1.0 / self._scaler).astype(jnp.float32)
        self._clamp_lo = (self._repr_min - self._zero_point).astype(jnp.float32)

    def forward(self, x):
        if self.per_channel:
            C = x.shape[0]
            x2d = x.reshape(C, -1)  # keep dtype: bf16 weights stream as bf16
            inv_s, s, lo = self._inv_scaler, self._scaler, self._clamp_lo
        else:
            # Per-tensor: one qparam set for everything, so any 2-D factorization is
            # valid.  Use a sublane-dense shape instead of [1, N] so every vreg is
            # fully utilized and stores stay unmasked.
            rows, cols = _per_tensor_2d(x.size, x.dtype)
            x2d = x.reshape(rows, cols)
            inv_s = jnp.broadcast_to(self._inv_scaler, (rows, 1))
            s = jnp.broadcast_to(self._scaler, (rows, 1))
            lo = jnp.broadcast_to(self._clamp_lo, (rows, 1))
        out2d = uniform_affine_quant_forward(x2d, inv_s, s, lo, self._q_range)
        return out2d.reshape(x.shape)


def _reference_checks(w, quant, out):
    """Assert kernel output against the folded math and the original module formula."""
    C = w.shape[0] if quant.per_channel else 1
    if quant.per_channel:
        x2d = w.reshape(C, -1).astype(jnp.float32)
    else:
        x2d = w.reshape(1, -1).astype(jnp.float32)
    inv_s = quant._inv_scaler if quant.per_channel else quant._inv_scaler.reshape(1, 1)
    s = quant._scaler if quant.per_channel else quant._scaler.reshape(1, 1)
    lo = quant._clamp_lo if quant.per_channel else quant._clamp_lo.reshape(1, 1)
    zp = quant._zero_point if quant.per_channel else quant._zero_point.reshape(1, 1)

    # Reference 1: identical folded math in plain JAX (tight kernel-correctness check).
    q = jnp.clip(jnp.round(x2d * inv_s), lo, lo + quant._q_range)
    ref_folded = (q * s).reshape(w.shape)
    assert jnp.allclose(out, ref_folded, atol=1e-6, rtol=0.0), "kernel != folded ref"

    # Reference 2: original module formula (x / scaler, +zp, clamp, dequant).
    # reciprocal-mul vs divide can flip round() only on ulp-level .5 ties, i.e. by at
    # most one quantization step, so bound the deviation by one step.
    q2 = jnp.clip(jnp.round(x2d / s) + zp, quant._repr_min, quant._repr_max)
    ref_module = ((q2 - zp) * s).reshape(w.shape)
    max_step = float(jnp.max(s))
    assert float(jnp.max(jnp.abs(out - ref_module))) <= max_step * 1.0001, \
        "kernel deviates from module semantics by more than one quant step"


if __name__ == "__main__":
    # TODO(synk): round_ste's straight-through gradient (backward) is not ported;
    # this implements the forward pass only, as specified.
    key = jax.random.PRNGKey(0)
    k1, k2 = jax.random.split(key)

    # 1) Per-channel, lane-aligned F: OC=16, IC=4, KH=KW=16 -> F = 1024.
    w = jax.random.normal(k1, (16, 4, 16, 16), dtype=jnp.float32)
    quant = UniformAffineQuantizerJAX(w, dst_dtype="INT8", per_channel=True)
    out = jax.block_until_ready(quant.forward(w))
    _reference_checks(w, quant, out)

    # 2) Per-channel, ragged F (exercises the no-pad masked trailing block): F = 147.
    w2 = jax.random.normal(k2, (16, 3, 7, 7), dtype=jnp.float32)
    quant2 = UniformAffineQuantizerJAX(w2, dst_dtype="INT4", per_channel=True)
    out2 = jax.block_until_ready(quant2.forward(w2))
    _reference_checks(w2, quant2, out2)

    # 3) Per-tensor (exercises the sublane-dense per-tensor layout).
    quant3 = UniformAffineQuantizerJAX(w, dst_dtype="INT8", per_channel=False)
    out3 = jax.block_until_ready(quant3.forward(w))
    _reference_checks(w, quant3, out3)

    print("KERNEL_OK")
</pallas_src>

<mosaic_0001>
module attributes {stable_mosaic.version = 11 : i64} {
  func.func @_qdq_kernel(%arg0: i32, %arg1: i32, %arg2: memref<16x1xf32, #tpu.memory_space<vmem>>, %arg3: memref<16x1xf32, #tpu.memory_space<vmem>>, %arg4: memref<16x1xf32, #tpu.memory_space<vmem>>, %arg5: memref<16x1024xf32, #tpu.memory_space<vmem>>, %arg6: memref<16x1024xf32, #tpu.memory_space<vmem>>) attributes {dimension_semantics = [#tpu.dimension_semantics<parallel>, #tpu.dimension_semantics<parallel>], iteration_bounds = array<i64: 1, 1>, scalar_prefetch = 0 : i64, scratch_operands = 0 : i64, tpu.core_type = #tpu.core_type<tc>, window_params = [{transform_indices = @transform_0, window_bounds = array<i64: 16, 1>}, {transform_indices = @transform_1, window_bounds = array<i64: 16, 1>}, {transform_indices = @transform_2, window_bounds = array<i64: 16, 1>}, {transform_indices = @transform_3, window_bounds = array<i64: 16, 1024>}, {transform_indices = @transform_4, window_bounds = array<i64: 16, 1024>}]} {
    %c0 = arith.constant 0 : index
    %c0_0 = arith.constant 0 : index
    %0 = vector.load %arg5[%c0, %c0_0] : memref<16x1024xf32, #tpu.memory_space<vmem>>, vector<16x1024xf32>
    %c0_1 = arith.constant 0 : index
    %c0_2 = arith.constant 0 : index
    %1 = vector.load %arg2[%c0_1, %c0_2] : memref<16x1xf32, #tpu.memory_space<vmem>>, vector<16x1xf32>
    %c0_3 = arith.constant 0 : index
    %c0_4 = arith.constant 0 : index
    %2 = vector.load %arg3[%c0_3, %c0_4] : memref<16x1xf32, #tpu.memory_space<vmem>>, vector<16x1xf32>
    %c0_5 = arith.constant 0 : index
    %c0_6 = arith.constant 0 : index
    %3 = vector.load %arg4[%c0_5, %c0_6] : memref<16x1xf32, #tpu.memory_space<vmem>>, vector<16x1xf32>
    %cst = arith.constant 2.550000e+02 : f32
    %4 = vector.broadcast %cst : f32 to vector<16x1xf32>
    %5 = arith.addf %3, %4 : vector<16x1xf32>
    %6 = vector.broadcast %1 : vector<16x1xf32> to vector<16x1024xf32>
    %7 = arith.mulf %0, %6 : vector<16x1024xf32>
    %8 = math.roundeven %7 : vector<16x1024xf32>
    %9 = vector.broadcast %3 : vector<16x1xf32> to vector<16x1024xf32>
    %10 = arith.maximumf %9, %8 : vector<16x1024xf32>
    %11 = vector.broadcast %5 : vector<16x1xf32> to vector<16x1024xf32>
    %12 = arith.minimumf %11, %10 : vector<16x1024xf32>
    %13 = vector.broadcast %2 : vector<16x1xf32> to vector<16x1024xf32>
    %14 = arith.mulf %12, %13 : vector<16x1024xf32>
    %c0_7 = arith.constant 0 : index
    %c0_8 = arith.constant 0 : index
    %15 = vector.load %arg6[%c0_7, %c0_8] : memref<16x1024xf32, #tpu.memory_space<vmem>>, vector<16x1024xf32>
    tpu.vector_store %arg6[%c0_7, %c0_8], %14 {strides = array<i32>} : memref<16x1024xf32, #tpu.memory_space<vmem>>, vector<16x1024xf32>,
    return
  }
  func.func @transform_0(%arg0: i32, %arg1: i32) -> (i32, i32) {
    %c0_i32 = arith.constant 0 : i32
    %c0_i32_0 = arith.constant 0 : i32
    return %arg0, %c0_i32 : i32, i32
  }
  func.func @transform_1(%arg0: i32, %arg1: i32) -> (i32, i32) {
    %c0_i32 = arith.constant 0 : i32
    %c0_i32_0 = arith.constant 0 : i32
    return %arg0, %c0_i32 : i32, i32
  }
  func.func @transform_2(%arg0: i32, %arg1: i32) -> (i32, i32) {
    %c0_i32 = arith.constant 0 : i32
    %c0_i32_0 = arith.constant 0 : i32
    return %arg0, %c0_i32 : i32, i32
  }
  func.func @transform_3(%arg0: i32, %arg1: i32) -> (i32, i32) {
    %c0_i32 = arith.constant 0 : i32
    return %arg0, %arg1 : i32, i32
  }
  func.func @transform_4(%arg0: i32, %arg1: i32) -> (i32, i32) {
    %c0_i32 = arith.constant 0 : i32
    return %arg0, %arg1 : i32, i32
  }
}

</mosaic_0001>

<llo_original>
// kernel: tpu_custom_call.1
$region0: #{tpu_custom_call.1}
  #allocation0 [shape = 'u32[]', space=smem, size = 0x4, offset = 0x4, fixed_abs, tag = 'smem constant byte address 0x4 - core index']
  #allocation1 [shape = 'u32[144,128]{1,0:T(1,128)}', space=vmem, size = 0x12000, scoped, tag = 'internal scratch']
  %s0 = inlined_call_operand.vmem [shape: f32[16,1], index: 0, kind: input, shape index: {}]
  %s1 = inlined_call_operand.vmem [shape: f32[16,1], index: 1, kind: input, shape index: {}]
  %s2 = inlined_call_operand.vmem [shape: f32[16,1], index: 2, kind: input, shape index: {}]
  %s3 = inlined_call_operand.hbm [shape: f32[16,1024], index: 3, kind: input, shape index: {}]
  %s4 = inlined_call_operand.hbm [shape: f32[16,1024], index: 4, kind: output, shape index: {}]
  %s5 = sld [smem:[#allocation0]]
  $region30: #{tpu_custom_call.1} parent=0
    _
  %s7 = ssub.s32 1, %s5
  %s8 = scalar_select 0, %s7, %s5
  $region1: #{tpu_custom_call.1} parent=0
    #allocation2 [shape = 'u8[65536]{0}', space=vmem, size = 0x10000, scoped, tag = 'input window, operand 3, single buffered']
    #allocation3 [shape = 's32[1]{0}', space=sflag, size = 0x4, scoped, tag = 'scoped memory for tpu_custom_call.1']
    #allocation4 [shape = 's32[1]{0}', space=sflag, size = 0x4, scoped, tag = 'scoped memory for tpu_custom_call.1']
    #allocation5 [shape = 'u8[65536]{0}', space=vmem, size = 0x10000, scoped, tag = 'output window, operand 0, single buffered']
    %9 = vsyncpa [#allocation3], 0
    %10 = vsyncpa [#allocation4], 0
    // Predicated region
    $region2: #{tpu_custom_call.1} parent=1 // pred_check
      _
    $region3: #{tpu_custom_call.1} parent=1 // pred_check_branch
      %12 = sbr.rel (0) target = $region5
    $region4: #{tpu_custom_call.1} parent=1 // pred_region
      _
    $region5: #{tpu_custom_call.1} parent=1 // pred_fallthru
      _
    // Predicated region
    $region6: #{tpu_custom_call.1} parent=1 // pred_check
      _
    $region7: #{tpu_custom_call.1} parent=1 // pred_check_branch
      %14 = sbr.rel (0) target = $region9
    $region8: #{tpu_custom_call.1} parent=1 // pred_region
      _
    $region9: #{tpu_custom_call.1} parent=1 // pred_fallthru
      _
    // Predicated region
    $region10: #{tpu_custom_call.1} parent=1 // pred_check
      _
    $region11: #{tpu_custom_call.1} parent=1 // pred_check_branch
      %16 = sbr.rel (0) target = $region13
    $region12: #{tpu_custom_call.1} parent=1 // pred_region
      _
    $region13: #{tpu_custom_call.1} parent=1 // pred_fallthru
      _
    // Predicated region
    $region14: #{tpu_custom_call.1} parent=1 // pred_check
      _
    $region15: #{tpu_custom_call.1} parent=1 // pred_check_branch
      %18 = sbr.rel (0) target = $region17
    $region16: #{tpu_custom_call.1} parent=1 // pred_region
      %s20 = ssub.s32 2048, 2048
      %21 = vsyncadd [#allocation3], %s20
      %s22 = sshll.u32 [#allocation2], 4
      %s23 = int_to_ptr.vmem [resolvable:$true] %s22
      %28 = dma.hbm_to_vmem [thread:$0]  %s3, 2048, %s23, [#allocation3], 1024, 1024, 64
    $region17: #{tpu_custom_call.1} parent=1 // pred_fallthru
      _
    // Predicated region
    $region18: #{tpu_custom_call.1} parent=1 // pred_check
      _
    $region19: #{tpu_custom_call.1} parent=1 // pred_check_branch
      %30 = sbr.rel (0) target = $region21
    $region20: #{tpu_custom_call.1} parent=1 // pred_region
      %31 = dma.done [#allocation3], 2048
    $region21: #{tpu_custom_call.1} parent=1 // pred_fallthru
      _
    %v32 = vld [vmem:[#allocation2] sm:$0xff]
    %v33 = vld [vmem:[#allocation2 + $0x8] sm:$0xff]
    %v34 = vld [vmem:[#allocation2 + $0x10] sm:$0xff]
    %v35 = vld [vmem:[#allocation2 + $0x18] sm:$0xff]
    %v36 = vld [vmem:[#allocation2 + $0x20] sm:$0xff]
    %v37 = vld [vmem:[#allocation2 + $0x28] sm:$0xff]
    %v38 = vld [vmem:[#allocation2 + $0x30] sm:$0xff]
    %v39 = vld [vmem:[#allocation2 + $0x38] sm:$0xff]
    %v40 = vld [vmem:[#allocation2 + $0x40] sm:$0xff]
    %v41 = vld [vmem:[#allocation2 + $0x48] sm:$0xff]
    %v42 = vld [vmem:[#allocation2 + $0x50] sm:$0xff]
    %v43 = vld [vmem:[#allocation2 + $0x58] sm:$0xff]
    %v44 = vld [vmem:[#allocation2 + $0x60] sm:$0xff]
    %v45 = vld [vmem:[#allocation2 + $0x68] sm:$0xff]
    %v46 = vld [vmem:[#allocation2 + $0x70] sm:$0xff]
    %v47 = vld [vmem:[#allocation2 + $0x78] sm:$0xff]
    %v48 = vld [vmem:[%s0] sm:$0xff]
    %v49 = vld [vmem:[%s0 + $0x8] sm:$0xff]
    %v50 = vld [vmem:[%s1] sm:$0xff]
    %v51 = vld [vmem:[%s1 + $0x8] sm:$0xff]
    %v52 = vld [vmem:[%s2] sm:$0xff]
    %v53 = vld [vmem:[%s2 + $0x8] sm:$0xff]
    %v54 = vadd.f32 %v52, 255.0
    %v55 = vadd.f32 %v53, 255.0
    %57 = vset.pattern.permute.xlu0 0
    %58 = vperm.xlu0 %57, %v48
    %v59 = vpop.permute.xlu0 %58
    %62 = vset.pattern.permute.xlu0 0
    %63 = vperm.xlu0 %62, %v49
    %v64 = vpop.permute.xlu0 %63
    %v66 = vmul.f32 %v32, %v59
    %v67 = vmul.f32 %v33, %v59
    %v68 = vmul.f32 %v34, %v59
    %v69 = vmul.f32 %v35, %v59
    %v70 = vmul.f32 %v36, %v59
    %v71 = vmul.f32 %v37, %v59
    %v72 = vmul.f32 %v38, %v59
    %v73 = vmul.f32 %v39, %v59
    %v74 = vmul.f32 %v40, %v64
    %v75 = vmul.f32 %v41, %v64
    %v76 = vmul.f32 %v42, %v64
    %v77 = vmul.f32 %v43, %v64
    %v78 = vmul.f32 %v44, %v64
    %v79 = vmul.f32 %v45, %v64
    %v80 = vmul.f32 %v46, %v64
    %v81 = vmul.f32 %v47, %v64
    %v82 = vround.ne.pseudo %v66
    %v83 = vround.ne.pseudo %v67
    %v84 = vround.ne.pseudo %v68
    %v85 = vround.ne.pseudo %v69
    %v86 = vround.ne.pseudo %v70
    %v87 = vround.ne.pseudo %v71
    %v88 = vround.ne.pseudo %v72
    %v89 = vround.ne.pseudo %v73
    %v90 = vround.ne.pseudo %v74
    %v91 = vround.ne.pseudo %v75
    %v92 = vround.ne.pseudo %v76
    %v93 = vround.ne.pseudo %v77
    %v94 = vround.ne.pseudo %v78
    %v95 = vround.ne.pseudo %v79
    %v96 = vround.ne.pseudo %v80
    %v97 = vround.ne.pseudo %v81
    %99 = vset.pattern.permute.xlu0 0
    %100 = vperm.xlu0 %99, %v52
    %v101 = vpop.permute.xlu0 %100
    %104 = vset.pattern.permute.xlu0 0
    %105 = vperm.xlu0 %104, %v53
    %v106 = vpop.permute.xlu0 %105
    %v108 = vmax.f32 %v101, %v82
    %v109 = vmax.f32 %v101, %v83
    %v110 = vmax.f32 %v101, %v84
    %v111 = vmax.f32 %v101, %v85
    %v112 = vmax.f32 %v101, %v86
    %v113 = vmax.f32 %v101, %v87
    %v114 = vmax.f32 %v101, %v88
    %v115 = vmax.f32 %v101, %v89
    %v116 = vmax.f32 %v106, %v90
    %v117 = vmax.f32 %v106, %v91
    %v118 = vmax.f32 %v106, %v92
    %v119 = vmax.f32 %v106, %v93
    %v120 = vmax.f32 %v106, %v94
    %v121 = vmax.f32 %v106, %v95
    %v122 = vmax.f32 %v106, %v96
    %v123 = vmax.f32 %v106, %v97
    %125 = vset.pattern.permute.xlu0 0
    %126 = vperm.xlu0 %125, %v54
    %v127 = vpop.permute.xlu0 %126
    %130 = vset.pattern.permute.xlu0 0
    %131 = vperm.xlu0 %130, %v55
    %v132 = vpop.permute.xlu0 %131
    %v134 = vmin.f32 %v127, %v108
    %v135 = vmin.f32 %v127, %v109
    %v136 = vmin.f32 %v127, %v110
    %v137 = vmin.f32 %v127, %v111
    %v138 = vmin.f32 %v127, %v112
    %v139 = vmin.f32 %v127, %v113
    %v140 = vmin.f32 %v127, %v114
    %v141 = vmin.f32 %v127, %v115
    %v142 = vmin.f32 %v132, %v116
    %v143 = vmin.f32 %v132, %v117
    %v144 = vmin.f32 %v132, %v118
    %v145 = vmin.f32 %v132, %v119
    %v146 = vmin.f32 %v132, %v120
    %v147 = vmin.f32 %v132, %v121
    %v148 = vmin.f32 %v132, %v122
    %v149 = vmin.f32 %v132, %v123
    %151 = vset.pattern.permute.xlu0 0
    %152 = vperm.xlu0 %151, %v50
    %v153 = vpop.permute.xlu0 %152
    %156 = vset.pattern.permute.xlu0 0
    %157 = vperm.xlu0 %156, %v51
    %v158 = vpop.permute.xlu0 %157
    %v160 = vmul.f32 %v134, %v153
    %v161 = vmul.f32 %v135, %v153
    %v162 = vmul.f32 %v136, %v153
    %v163 = vmul.f32 %v137, %v153
    %v164 = vmul.f32 %v138, %v153
    %v165 = vmul.f32 %v139, %v153
    %v166 = vmul.f32 %v140, %v153
    %v167 = vmul.f32 %v141, %v153
    %v168 = vmul.f32 %v142, %v158
    %v169 = vmul.f32 %v143, %v158
    %v170 = vmul.f32 %v144, %v158
    %v171 = vmul.f32 %v145, %v158
    %v172 = vmul.f32 %v146, %v158
    %v173 = vmul.f32 %v147, %v158
    %v174 = vmul.f32 %v148, %v158
    %v175 = vmul.f32 %v149, %v158
    %176 = vst [vmem:[#allocation5] sm:$0xff] %v160
    %177 = vst [vmem:[#allocation5 + $0x8] sm:$0xff] %v161
    %178 = vst [vmem:[#allocation5 + $0x10] sm:$0xff] %v162
    %179 = vst [vmem:[#allocation5 + $0x18] sm:$0xff] %v163
    %180 = vst [vmem:[#allocation5 + $0x20] sm:$0xff] %v164
    %181 = vst [vmem:[#allocation5 + $0x28] sm:$0xff] %v165
    %182 = vst [vmem:[#allocation5 + $0x30] sm:$0xff] %v166
    %183 = vst [vmem:[#allocation5 + $0x38] sm:$0xff] %v167
    %184 = vst [vmem:[#allocation5 + $0x40] sm:$0xff] %v168
    %185 = vst [vmem:[#allocation5 + $0x48] sm:$0xff] %v169
    %186 = vst [vmem:[#allocation5 + $0x50] sm:$0xff] %v170
    %187 = vst [vmem:[#allocation5 + $0x58] sm:$0xff] %v171
    %188 = vst [vmem:[#allocation5 + $0x60] sm:$0xff] %v172
    %189 = vst [vmem:[#allocation5 + $0x68] sm:$0xff] %v173
    %190 = vst [vmem:[#allocation5 + $0x70] sm:$0xff] %v174
    %191 = vst [vmem:[#allocation5 + $0x78] sm:$0xff] %v175
    // Predicated region
    $region22: #{tpu_custom_call.1} parent=1 // pred_check
      _
    $region23: #{tpu_custom_call.1} parent=1 // pred_check_branch
      %193 = sbr.rel (0) target = $region25
    $region24: #{tpu_custom_call.1} parent=1 // pred_region
      %s195 = ssub.s32 2048, 2048
      %196 = vsyncadd [#allocation4], %s195
      %s197 = sshll.u32 [#allocation5], 4
      %s198 = int_to_ptr.vmem [resolvable:$true] %s197
      %203 = dma.vmem_to_hbm [thread:$0]  %s198, 2048, %s4, [#allocation4], 1024, 1024, 64
    $region25: #{tpu_custom_call.1} parent=1 // pred_fallthru
      _
    // Predicated region
    $region26: #{tpu_custom_call.1} parent=1 // pred_check
      _
    $region27: #{tpu_custom_call.1} parent=1 // pred_check_branch
      %205 = sbr.rel (0) target = $region29
    $region28: #{tpu_custom_call.1} parent=1 // pred_region
      %206 = dma.done [#allocation4], 2048
    $region29: #{tpu_custom_call.1} parent=1 // pred_fallthru
      _
    %207 = vsyncpa [#allocation3], 1
    %208 = vsyncpa [#allocation4], 1

</llo_original>
